<compile_context>
chip_gen: v7x
topology: tpu7x:2x2x1
jax: 0.10.0
libtpu: 0.0.40
codegen_flags: <defaults>
</compile_context>

<pallas_src>
import math

import jax
import jax.numpy as jnp
from jax.experimental import pallas as pl
from jax.experimental.pallas import tpu as pltpu


def _round_up(x, m):
    return ((x + m - 1) // m) * m


def _cdiv(a, b):
    return -(-a // b)


def _vmem_capacity_bytes():
    """Per-core VMEM capacity; conservative fallback if the query fails."""
    try:
        info = pltpu.get_tpu_info()
        cap = getattr(info, "vmem_capacity_bytes", None)
        if cap:
            return int(cap)
    except Exception:
        pass
    return 64 * 1024 * 1024  # v7x per-TensorCore size (smallest in the fleet)


# ---------------------------------------------------------------------------
# Kernels
# ---------------------------------------------------------------------------

def _make_single_k_kernel(G, I_pad, O_pad):
    """kpg == 1 fast path: one (batch-tile, G-group block) per grid step.

    x_ref : (TB, G*I_pad)       activations for G consecutive groups
    w_ref : (G, I_pad, O_pad)   weights for those groups
    b_ref : (G, 1, O_pad)       biases
    o_ref : (TB, G*O_pad)       lane-dense output tile (written once, no acc)
    """
    def kernel(x_ref, w_ref, b_ref, o_ref):
        for g in range(G):  # static, unrolled loop over the folded groups
            xg = x_ref[:, g * I_pad:(g + 1) * I_pad]
            acc = jnp.dot(xg, w_ref[g], preferred_element_type=jnp.float32)
            o_ref[:, g * O_pad:(g + 1) * O_pad] = (
                acc + b_ref[g].astype(jnp.float32)).astype(o_ref.dtype)
    return kernel


def _tiled_k_kernel_f32(x_ref, w_ref, b_ref, o_ref):
    """kpg > 1, float32 output: accumulate directly into the resident o_ref."""
    k = pl.program_id(2)
    acc = jnp.dot(x_ref[...], w_ref[...], preferred_element_type=jnp.float32)

    @pl.when(k == 0)
    def _init():
        o_ref[...] = acc + b_ref[...].astype(jnp.float32)

    @pl.when(k != 0)
    def _accumulate():
        o_ref[...] += acc


def _tiled_k_kernel_narrow(x_ref, w_ref, b_ref, o_ref, acc_ref):
    """kpg > 1, narrow output dtype: fp32 scratch accumulator."""
    k = pl.program_id(2)
    acc = jnp.dot(x_ref[...], w_ref[...], preferred_element_type=jnp.float32)

    @pl.when(k == 0)
    def _init():
        acc_ref[...] = acc

    @pl.when(k != 0)
    def _accumulate():
        acc_ref[...] += acc

    @pl.when(k == pl.num_programs(2) - 1)
    def _finalize():
        o_ref[...] = (acc_ref[...] + b_ref[...].astype(jnp.float32)
                      ).astype(o_ref.dtype)


# ---------------------------------------------------------------------------
# Wrapper
# ---------------------------------------------------------------------------

def grouped_linear(x, weight, bias, *, block_b=512, block_k=512, interpret=False):
    """x: (B, N, I), weight: (N, I, O), bias: (N, O) -> (B, N, O)."""
    B, N, I = x.shape
    N_w, I_w, O = weight.shape
    assert (N_w, I_w) == (N, I) and bias.shape == (N, O)
    out_dtype = x.dtype
    elt = jnp.dtype(x.dtype).itemsize
    sub = max(8, 32 // elt)            # sublane alignment: 8 f32 / 16 bf16 / 32 int8

    # ---- generation-aware VMEM budget --------------------------------------
    vmem_cap = _vmem_capacity_bytes()
    if vmem_cap >= 100 * 1024 * 1024:  # 128 MiB parts (v5e / v6e): grow tiles
        budget = 80 * 1024 * 1024
        limit_cap = 96 * 1024 * 1024
    else:                              # 64 MiB per TC (v7x): leave headroom
        budget = 36 * 1024 * 1024
        limit_cap = 50 * 1024 * 1024

    # ---- lane-dense feature padding -----------------------------------------
    O_pad = _round_up(O, 128)
    I_128 = _round_up(I, 128)

    # ---- contraction tiling (no over-padding of I) --------------------------
    if I_128 <= block_k:
        kpg, TK, I_pad = 1, I_128, I_128
    else:
        kpg = _cdiv(I_128, block_k)
        TK = _round_up(_cdiv(I_128, kpg), 128)
        I_pad = TK * kpg

    # ---- batch tiling: balanced tiles, minimal padding ----------------------
    b_tiles = _cdiv(B, block_b)
    TB = _round_up(_cdiv(B, b_tiles), sub)
    B_pad = TB * b_tiles

    if kpg == 1:
        # -------------------- single-K fast path ----------------------------
        def est(tb, g):
            blk = tb * g * I_pad + g * I_pad * O_pad + g * O_pad + tb * g * O_pad
            return 2 * blk * elt      # double-buffered in/out tiles, no scratch

        # Fold several groups per step when the per-group problem is tiny.
        per_group = 2 * (TB * I_pad + I_pad * O_pad + O_pad + TB * O_pad) * elt
        g_cap = min(N, 16, max(1, (8 * 1024 * 1024) // max(per_group, 1)))
        G = max(d for d in range(1, g_cap + 1) if N % d == 0)

        while est(TB, G) > budget:
            if G > 1:
                G = max(d for d in range(1, G) if N % d == 0)
            elif TB > sub:
                b_tiles += 1
                TB = _round_up(_cdiv(B, b_tiles), sub)
                B_pad = TB * b_tiles
            else:
                break

        n_blocks = N // G
        vmem_est = est(TB, G)
        batch_major = b_tiles > n_blocks   # megacore: biggest axis leads

        kernel = _make_single_k_kernel(G, I_pad, O_pad)
        scratch_shapes = []

        if batch_major:
            grid = (b_tiles, n_blocks)
            x_map = lambda b, n: (b, n)
            w_map = lambda b, n: (n, 0, 0)
            bias_map = lambda b, n: (n, 0, 0)
            o_map = lambda b, n: (b, n)
        else:
            grid = (n_blocks, b_tiles)
            x_map = lambda n, b: (b, n)
            w_map = lambda n, b: (n, 0, 0)
            bias_map = lambda n, b: (n, 0, 0)
            o_map = lambda n, b: (b, n)
        dims = ("parallel", "parallel")

        in_specs = [
            pl.BlockSpec((TB, G * I_pad), x_map),
            pl.BlockSpec((G, I_pad, O_pad), w_map),
            pl.BlockSpec((G, 1, O_pad), bias_map),
        ]
        out_spec = pl.BlockSpec((TB, G * O_pad), o_map)

    else:
        # -------------------- tiled-contraction path ------------------------
        out_is_f32 = jnp.dtype(out_dtype) == jnp.dtype(jnp.float32)

        def est(tb, tk):
            blk = tb * tk + tk * O_pad + O_pad + tb * O_pad
            scratch = 0 if out_is_f32 else tb * O_pad * 4
            return 2 * blk * elt + scratch

        while est(TB, TK) > budget:
            if TK > 128:
                kpg += 1
                TK = _round_up(_cdiv(I_128, kpg), 128)
                I_pad = TK * kpg
            elif TB > sub:
                b_tiles += 1
                TB = _round_up(_cdiv(B, b_tiles), sub)
                B_pad = TB * b_tiles
            else:
                break

        vmem_est = est(TB, TK)
        batch_major = b_tiles > N
        kernel = _tiled_k_kernel_f32 if out_is_f32 else _tiled_k_kernel_narrow
        scratch_shapes = ([] if out_is_f32
                          else [pltpu.VMEM((TB, O_pad), jnp.float32)])

        kpg_ = kpg
        if batch_major:
            grid = (b_tiles, N, kpg)
            x_map = lambda b, n, k: (b, n * kpg_ + k)
            w_map = lambda b, n, k: (n, k, 0)
            bias_map = lambda b, n, k: (n, 0, 0)
            o_map = lambda b, n, k: (b, n)
        else:
            grid = (N, b_tiles, kpg)
            x_map = lambda n, b, k: (b, n * kpg_ + k)
            w_map = lambda n, b, k: (n, k, 0)
            bias_map = lambda n, b, k: (n, 0, 0)
            o_map = lambda n, b, k: (b, n)
        dims = ("parallel", "parallel", "arbitrary")

        in_specs = [
            pl.BlockSpec((TB, TK), x_map),
            pl.BlockSpec((None, TK, O_pad), w_map),
            pl.BlockSpec((None, 1, O_pad), bias_map),
        ]
        out_spec = pl.BlockSpec((TB, O_pad), o_map)

    vmem_limit = int(min(max(2 * vmem_est, 32 * 1024 * 1024), limit_cap))

    # ---- zero-pad (no-op for aligned shapes) + free contiguous 2-D views ----
    x_p = x
    if (B_pad, I_pad) != (B, I):
        x_p = jnp.pad(x, ((0, B_pad - B), (0, 0), (0, I_pad - I)))
    x2 = x_p.reshape(B_pad, N * I_pad)

    w_p = weight
    if (I_pad, O_pad) != (I, O):
        w_p = jnp.pad(weight, ((0, 0), (0, I_pad - I), (0, O_pad - O)))
    b_p = bias if O_pad == O else jnp.pad(bias, ((0, 0), (0, O_pad - O)))
    b3 = b_p.reshape(N, 1, O_pad)

    out2 = pl.pallas_call(
        kernel,
        out_shape=jax.ShapeDtypeStruct((B_pad, N * O_pad), out_dtype),
        grid_spec=pltpu.PrefetchScalarGridSpec(
            num_scalar_prefetch=0,
            grid=grid,
            in_specs=in_specs,
            out_specs=out_spec,
            scratch_shapes=scratch_shapes,
        ),
        compiler_params=pltpu.CompilerParams(
            dimension_semantics=dims,
            vmem_limit_bytes=vmem_limit,
        ),
        interpret=interpret,
    )(x2, w_p, b3)

    out = out2.reshape(B_pad, N, O_pad)
    if (B_pad, O_pad) != (B, O):
        out = out[:B, :, :O]
    return out


def init_params(key, num_linear, input_features, output_features, dtype=jnp.float32):
    """Matches L.reset_parameters: uniform(-sqrt(1/in), sqrt(1/in))."""
    bound = math.sqrt(1.0 / input_features)
    k_w, k_b = jax.random.split(key)
    weight = jax.random.uniform(
        k_w, (num_linear, input_features, output_features),
        minval=-bound, maxval=bound, dtype=dtype)
    bias = jax.random.uniform(
        k_b, (num_linear, output_features),
        minval=-bound, maxval=bound, dtype=dtype)
    return weight, bias


if __name__ == "__main__":
    key = jax.random.PRNGKey(0)
    k_x, k_p, k_x2, k_p2, k_x3, k_p3 = jax.random.split(key, 6)

    # 1) Small shapes implied by the module's forward (single-K fast path,
    #    group folding, lane padding).
    batch, num_linear, input_features, output_features = 2, 4, 32, 16
    x = jax.random.normal(k_x, (batch, num_linear, input_features),
                          dtype=jnp.float32)
    weight, bias = init_params(k_p, num_linear, input_features, output_features)

    out = jax.block_until_ready(grouped_linear(x, weight, bias))
    ref = jnp.einsum("bni,nio->bno", x, weight) + bias[None, :, :]
    assert out.shape == (batch, num_linear, output_features)
    assert jnp.allclose(out, ref, atol=1e-5, rtol=1e-5)

    # 2) Config exercising the tiled paths: batch tiling, K tiling with the
    #    resident f32 output accumulation, lane padding.
    b2, n2, i2, o2 = 70, 3, 300, 20
    x_big = jax.random.normal(k_x2, (b2, n2, i2), dtype=jnp.float32)
    w_big, bias_big = init_params(k_p2, n2, i2, o2)
    out_big = jax.block_until_ready(
        grouped_linear(x_big, w_big, bias_big, block_b=32, block_k=128))
    ref_big = jnp.einsum("bni,nio->bno", x_big, w_big) + bias_big[None, :, :]
    assert out_big.shape == (b2, n2, o2)
    assert jnp.allclose(out_big, ref_big, atol=2e-4, rtol=2e-4)

    # 3) Narrow-dtype (bf16) tiled path with the fp32 scratch accumulator.
    b3_, n3, i3, o3 = 20, 2, 260, 10
    x_bf = jax.random.normal(k_x3, (b3_, n3, i3), dtype=jnp.bfloat16)
    w_bf, bias_bf = init_params(k_p3, n3, i3, o3, dtype=jnp.bfloat16)
    out_bf = jax.block_until_ready(
        grouped_linear(x_bf, w_bf, bias_bf, block_k=128))
    ref_bf = (jnp.einsum("bni,nio->bno",
                         x_bf.astype(jnp.float32), w_bf.astype(jnp.float32))
              + bias_bf.astype(jnp.float32)[None, :, :]).astype(jnp.bfloat16)
    assert out_bf.shape == (b3_, n3, o3)
    assert jnp.allclose(out_bf.astype(jnp.float32),
                        ref_bf.astype(jnp.float32), atol=2e-2, rtol=2e-2)

    print("KERNEL_OK")
</pallas_src>

<mosaic_0001>
module attributes {stable_mosaic.version = 11 : i64} {
  func.func @kernel(%arg0: i32, %arg1: i32, %arg2: memref<8x512xf32, #tpu.memory_space<vmem>>, %arg3: memref<4x128x128xf32, #tpu.memory_space<vmem>>, %arg4: memref<4x1x128xf32, #tpu.memory_space<vmem>>, %arg5: memref<8x512xf32, #tpu.memory_space<vmem>>) attributes {dimension_semantics = [#tpu.dimension_semantics<parallel>, #tpu.dimension_semantics<parallel>], iteration_bounds = array<i64: 1, 1>, scalar_prefetch = 0 : i64, scratch_operands = 0 : i64, tpu.core_type = #tpu.core_type<tc>, window_params = [{transform_indices = @transform_0, window_bounds = array<i64: 8, 512>}, {transform_indices = @transform_1, window_bounds = array<i64: 4, 128, 128>}, {transform_indices = @transform_2, window_bounds = array<i64: 4, 1, 128>}, {transform_indices = @transform_3, window_bounds = array<i64: 8, 512>}]} {
    %c0 = arith.constant 0 : index
    %c0_0 = arith.constant 0 : index
    %0 = vector.load %arg2[%c0, %c0_0] : memref<8x512xf32, #tpu.memory_space<vmem>>, vector<8x128xf32>
    %c0_1 = arith.constant 0 : index
    %c0_2 = arith.constant 0 : index
    %c0_3 = arith.constant 0 : index
    %1 = vector.load %arg3[%c0_1, %c0_2, %c0_3] : memref<4x128x128xf32, #tpu.memory_space<vmem>>, vector<1x128x128xf32>
    %2 = vector.shape_cast %1 : vector<1x128x128xf32> to vector<128x128xf32>
    %cst = arith.constant dense<0.000000e+00> : vector<8x128xf32>
    %3 = tpu.matmul %0, %2, %cst {dimension_numbers = #tpu.dot_dimension_numbers<[1], [0], [0], [1], [0, 0, 1, 1], [], []>} : vector<8x128xf32>, vector<128x128xf32>, vector<8x128xf32> -> vector<8x128xf32>
    %c0_4 = arith.constant 0 : index
    %c0_5 = arith.constant 0 : index
    %c0_6 = arith.constant 0 : index
    %4 = vector.load %arg4[%c0_4, %c0_5, %c0_6] : memref<4x1x128xf32, #tpu.memory_space<vmem>>, vector<1x1x128xf32>
    %5 = vector.shape_cast %4 : vector<1x1x128xf32> to vector<1x128xf32>
    %6 = vector.broadcast %5 : vector<1x128xf32> to vector<8x128xf32>
    %7 = arith.addf %3, %6 : vector<8x128xf32>
    %c0_7 = arith.constant 0 : index
    %c0_8 = arith.constant 0 : index
    %8 = vector.load %arg5[%c0_7, %c0_8] : memref<8x512xf32, #tpu.memory_space<vmem>>, vector<8x128xf32>
    tpu.vector_store %arg5[%c0_7, %c0_8], %7 {strides = array<i32>} : memref<8x512xf32, #tpu.memory_space<vmem>>, vector<8x128xf32>,
    %c0_9 = arith.constant 0 : index
    %c128 = arith.constant 128 : index
    %9 = vector.load %arg2[%c0_9, %c128] : memref<8x512xf32, #tpu.memory_space<vmem>>, vector<8x128xf32>
    %c1 = arith.constant 1 : index
    %c0_10 = arith.constant 0 : index
    %c0_11 = arith.constant 0 : index
    %10 = vector.load %arg3[%c1, %c0_10, %c0_11] : memref<4x128x128xf32, #tpu.memory_space<vmem>>, vector<1x128x128xf32>
    %11 = vector.shape_cast %10 : vector<1x128x128xf32> to vector<128x128xf32>
    %cst_12 = arith.constant dense<0.000000e+00> : vector<8x128xf32>
    %12 = tpu.matmul %9, %11, %cst_12 {dimension_numbers = #tpu.dot_dimension_numbers<[1], [0], [0], [1], [0, 0, 1, 1], [], []>} : vector<8x128xf32>, vector<128x128xf32>, vector<8x128xf32> -> vector<8x128xf32>
    %c1_13 = arith.constant 1 : index
    %c0_14 = arith.constant 0 : index
    %c0_15 = arith.constant 0 : index
    %13 = vector.load %arg4[%c1_13, %c0_14, %c0_15] : memref<4x1x128xf32, #tpu.memory_space<vmem>>, vector<1x1x128xf32>
    %14 = vector.shape_cast %13 : vector<1x1x128xf32> to vector<1x128xf32>
    %15 = vector.broadcast %14 : vector<1x128xf32> to vector<8x128xf32>
    %16 = arith.addf %12, %15 : vector<8x128xf32>
    %c0_16 = arith.constant 0 : index
    %c128_17 = arith.constant 128 : index
    %17 = vector.load %arg5[%c0_16, %c128_17] : memref<8x512xf32, #tpu.memory_space<vmem>>, vector<8x128xf32>
    tpu.vector_store %arg5[%c0_16, %c128_17], %16 {strides = array<i32>} : memref<8x512xf32, #tpu.memory_space<vmem>>, vector<8x128xf32>,
    %c0_18 = arith.constant 0 : index
    %c256 = arith.constant 256 : index
    %18 = vector.load %arg2[%c0_18, %c256] : memref<8x512xf32, #tpu.memory_space<vmem>>, vector<8x128xf32>
    %c2 = arith.constant 2 : index
    %c0_19 = arith.constant 0 : index
    %c0_20 = arith.constant 0 : index
    %19 = vector.load %arg3[%c2, %c0_19, %c0_20] : memref<4x128x128xf32, #tpu.memory_space<vmem>>, vector<1x128x128xf32>
    %20 = vector.shape_cast %19 : vector<1x128x128xf32> to vector<128x128xf32>
    %cst_21 = arith.constant dense<0.000000e+00> : vector<8x128xf32>
    %21 = tpu.matmul %18, %20, %cst_21 {dimension_numbers = #tpu.dot_dimension_numbers<[1], [0], [0], [1], [0, 0, 1, 1], [], []>} : vector<8x128xf32>, vector<128x128xf32>, vector<8x128xf32> -> vector<8x128xf32>
    %c2_22 = arith.constant 2 : index
    %c0_23 = arith.constant 0 : index
    %c0_24 = arith.constant 0 : index
    %22 = vector.load %arg4[%c2_22, %c0_23, %c0_24] : memref<4x1x128xf32, #tpu.memory_space<vmem>>, vector<1x1x128xf32>
    %23 = vector.shape_cast %22 : vector<1x1x128xf32> to vector<1x128xf32>
    %24 = vector.broadcast %23 : vector<1x128xf32> to vector<8x128xf32>
    %25 = arith.addf %21, %24 : vector<8x128xf32>
    %c0_25 = arith.constant 0 : index
    %c256_26 = arith.constant 256 : index
    %26 = vector.load %arg5[%c0_25, %c256_26] : memref<8x512xf32, #tpu.memory_space<vmem>>, vector<8x128xf32>
    tpu.vector_store %arg5[%c0_25, %c256_26], %25 {strides = array<i32>} : memref<8x512xf32, #tpu.memory_space<vmem>>, vector<8x128xf32>,
    %c0_27 = arith.constant 0 : index
    %c384 = arith.constant 384 : index
    %27 = vector.load %arg2[%c0_27, %c384] : memref<8x512xf32, #tpu.memory_space<vmem>>, vector<8x128xf32>
    %c3 = arith.constant 3 : index
    %c0_28 = arith.constant 0 : index
    %c0_29 = arith.constant 0 : index
    %28 = vector.load %arg3[%c3, %c0_28, %c0_29] : memref<4x128x128xf32, #tpu.memory_space<vmem>>, vector<1x128x128xf32>
    %29 = vector.shape_cast %28 : vector<1x128x128xf32> to vector<128x128xf32>
    %cst_30 = arith.constant dense<0.000000e+00> : vector<8x128xf32>
    %30 = tpu.matmul %27, %29, %cst_30 {dimension_numbers = #tpu.dot_dimension_numbers<[1], [0], [0], [1], [0, 0, 1, 1], [], []>} : vector<8x128xf32>, vector<128x128xf32>, vector<8x128xf32> -> vector<8x128xf32>
    %c3_31 = arith.constant 3 : index
    %c0_32 = arith.constant 0 : index
    %c0_33 = arith.constant 0 : index
    %31 = vector.load %arg4[%c3_31, %c0_32, %c0_33] : memref<4x1x128xf32, #tpu.memory_space<vmem>>, vector<1x1x128xf32>
    %32 = vector.shape_cast %31 : vector<1x1x128xf32> to vector<1x128xf32>
    %33 = vector.broadcast %32 : vector<1x128xf32> to vector<8x128xf32>
    %34 = arith.addf %30, %33 : vector<8x128xf32>
    %c0_34 = arith.constant 0 : index
    %c384_35 = arith.constant 384 : index
    %35 = vector.load %arg5[%c0_34, %c384_35] : memref<8x512xf32, #tpu.memory_space<vmem>>, vector<8x128xf32>
    tpu.vector_store %arg5[%c0_34, %c384_35], %34 {strides = array<i32>} : memref<8x512xf32, #tpu.memory_space<vmem>>, vector<8x128xf32>,
    return
  }
  func.func @transform_0(%arg0: i32, %arg1: i32) -> (i32, i32) {
    %c0_i32 = arith.constant 0 : i32
    return %arg1, %arg0 : i32, i32
  }
  func.func @transform_1(%arg0: i32, %arg1: i32) -> (i32, i32, i32) {
    %c0_i32 = arith.constant 0 : i32
    %c0_i32_0 = arith.constant 0 : i32
    %c0_i32_1 = arith.constant 0 : i32
    return %arg0, %c0_i32, %c0_i32_0 : i32, i32, i32
  }
  func.func @transform_2(%arg0: i32, %arg1: i32) -> (i32, i32, i32) {
    %c0_i32 = arith.constant 0 : i32
    %c0_i32_0 = arith.constant 0 : i32
    %c0_i32_1 = arith.constant 0 : i32
    return %arg0, %c0_i32, %c0_i32_0 : i32, i32, i32
  }
  func.func @transform_3(%arg0: i32, %arg1: i32) -> (i32, i32) {
    %c0_i32 = arith.constant 0 : i32
    return %arg1, %arg0 : i32, i32
  }
}

</mosaic_0001>

<llo_original>
// kernel: tpu_custom_call.1
$region0: #{tpu_custom_call.1}
  #allocation0 [shape = 'u32[]', space=smem, size = 0x4, offset = 0x4, fixed_abs, tag = 'smem constant byte address 0x4 - core index']
  #allocation1 [shape = 'u32[144,128]{1,0:T(1,128)}', space=vmem, size = 0x12000, scoped, tag = 'internal scratch']
  %s0 = inlined_call_operand.hbm [shape: f32[8,512], index: 0, kind: input, shape index: {}]
  %s1 = inlined_call_operand.hbm [shape: f32[4,128,128], index: 1, kind: input, shape index: {}]
  %s2 = inlined_call_operand.vmem [shape: f32[4,1,128], index: 2, kind: input, shape index: {}]
  %s3 = inlined_call_operand.hbm [shape: f32[8,512], index: 3, kind: output, shape index: {}]
  %s4 = sld [smem:[#allocation0]]
  $region30: #{tpu_custom_call.1} parent=0
    _
  %s6 = ssub.s32 1, %s4
  %s7 = scalar_select 0, %s6, %s4
  $region1: #{tpu_custom_call.1} parent=0
    #allocation2 [shape = 'u8[16384]{0}', space=vmem, size = 0x4000, scoped, tag = 'input window, operand 0, single buffered']
    #allocation3 [shape = 's32[1]{0}', space=sflag, size = 0x4, scoped, tag = 'scoped memory for tpu_custom_call.1']
    #allocation4 [shape = 's32[1]{0}', space=sflag, size = 0x4, scoped, tag = 'scoped memory for tpu_custom_call.1']
    #allocation5 [shape = 'u8[262144]{0}', space=vmem, size = 0x40000, scoped, tag = 'input window, operand 1, single buffered']
    #allocation6 [shape = 's32[1]{0}', space=sflag, size = 0x4, scoped, tag = 'scoped memory for tpu_custom_call.1']
    #allocation7 [shape = 'u8[16384]{0}', space=vmem, size = 0x4000, scoped, tag = 'output window, operand 0, single buffered']
    %8 = vsyncpa [#allocation3], 0
    %9 = vsyncpa [#allocation6], 0
    %10 = vsyncpa [#allocation4], 0
    // Predicated region
    $region2: #{tpu_custom_call.1} parent=1 // pred_check
      _
    $region3: #{tpu_custom_call.1} parent=1 // pred_check_branch
      %12 = sbr.rel (0) target = $region5
    $region4: #{tpu_custom_call.1} parent=1 // pred_region
      %s14 = ssub.s32 512, 512
      %15 = vsyncadd [#allocation3], %s14
      %s17 = sshll.u32 [#allocation2], 4
      %s18 = int_to_ptr.vmem [resolvable:$true] %s17
      %20 = dma.hbm_to_vmem [thread:$0]  %s0, 512, %s18, [#allocation3]
    $region5: #{tpu_custom_call.1} parent=1 // pred_fallthru
      _
    // Predicated region
    $region6: #{tpu_custom_call.1} parent=1 // pred_check
      _
    $region7: #{tpu_custom_call.1} parent=1 // pred_check_branch
      %22 = sbr.rel (0) target = $region9
    $region8: #{tpu_custom_call.1} parent=1 // pred_region
      %s24 = ssub.s32 8192, 8192
      %25 = vsyncadd [#allocation6], %s24
      %s26 = sshll.u32 [#allocation5], 4
      %s27 = int_to_ptr.vmem [resolvable:$true] %s26
      %32 = dma.hbm_to_vmem [thread:$0]  %s1, 8192, %s27, [#allocation6], 128, 128, 8
    $region9: #{tpu_custom_call.1} parent=1 // pred_fallthru
      _
    // Predicated region
    $region10: #{tpu_custom_call.1} parent=1 // pred_check
      _
    $region11: #{tpu_custom_call.1} parent=1 // pred_check_branch
      %34 = sbr.rel (0) target = $region13
    $region12: #{tpu_custom_call.1} parent=1 // pred_region
      _
    $region13: #{tpu_custom_call.1} parent=1 // pred_fallthru
      _
    // Predicated region
    $region14: #{tpu_custom_call.1} parent=1 // pred_check
      _
    $region15: #{tpu_custom_call.1} parent=1 // pred_check_branch
      %36 = sbr.rel (0) target = $region17
    $region16: #{tpu_custom_call.1} parent=1 // pred_region
      %37 = dma.done [#allocation3], 512
    $region17: #{tpu_custom_call.1} parent=1 // pred_fallthru
      _
    // Predicated region
    $region18: #{tpu_custom_call.1} parent=1 // pred_check
      _
    $region19: #{tpu_custom_call.1} parent=1 // pred_check_branch
      %39 = sbr.rel (0) target = $region21
    $region20: #{tpu_custom_call.1} parent=1 // pred_region
      %40 = dma.done [#allocation6], 8192
    $region21: #{tpu_custom_call.1} parent=1 // pred_fallthru
      _
    %v41 = vld [vmem:[#allocation2] sm:$0xff]
    %v42 = vld [vmem:[#allocation5] sm:$0xff]
    %v43 = vld [vmem:[#allocation5 + $0x8] sm:$0xff]
    %v44 = vld [vmem:[#allocation5 + $0x10] sm:$0xff]
    %v45 = vld [vmem:[#allocation5 + $0x18] sm:$0xff]
    %v46 = vld [vmem:[#allocation5 + $0x20] sm:$0xff]
    %v47 = vld [vmem:[#allocation5 + $0x28] sm:$0xff]
    %v48 = vld [vmem:[#allocation5 + $0x30] sm:$0xff]
    %v49 = vld [vmem:[#allocation5 + $0x38] sm:$0xff]
    %v50 = vld [vmem:[#allocation5 + $0x40] sm:$0xff]
    %v51 = vld [vmem:[#allocation5 + $0x48] sm:$0xff]
    %v52 = vld [vmem:[#allocation5 + $0x50] sm:$0xff]
    %v53 = vld [vmem:[#allocation5 + $0x58] sm:$0xff]
    %v54 = vld [vmem:[#allocation5 + $0x60] sm:$0xff]
    %v55 = vld [vmem:[#allocation5 + $0x68] sm:$0xff]
    %v56 = vld [vmem:[#allocation5 + $0x70] sm:$0xff]
    %v57 = vld [vmem:[#allocation5 + $0x78] sm:$0xff]
    %v58 = vld [vmem:[%s2] sm:$0x1]
    %v60 = vlaneseq
    %v61 = vshrl.u32 %v60, 7
    %v62 = vsub.s32 0, %v61
    %v63 = vrot.slane %v58, %v62
    %65 = vmatprep.subr.mxu0 0.0
    %66 = vmatpush1.msra.mxu0 %v42
    %67 = vmatprep.subr.mxu0 0.0
    %68 = vmatpush1.msra.mxu0 %v43
    %69 = vmatprep.subr.mxu0 0.0
    %70 = vmatpush1.msra.mxu0 %v44
    %71 = vmatprep.subr.mxu0 0.0
    %72 = vmatpush1.msra.mxu0 %v45
    %73 = vmatprep.subr.mxu0 0.0
    %74 = vmatpush1.msra.mxu0 %v46
    %75 = vmatprep.subr.mxu0 0.0
    %76 = vmatpush1.msra.mxu0 %v47
    %77 = vmatprep.subr.mxu0 0.0
    %78 = vmatpush1.msra.mxu0 %v48
    %79 = vmatprep.subr.mxu0 0.0
    %80 = vmatpush1.msra.mxu0 %v49
    %81 = vmatprep.subr.mxu0 0.0
    %82 = vmatpush1.msra.mxu0 %v50
    %83 = vmatprep.subr.mxu0 0.0
    %84 = vmatpush1.msra.mxu0 %v51
    %85 = vmatprep.subr.mxu0 0.0
    %86 = vmatpush1.msra.mxu0 %v52
    %87 = vmatprep.subr.mxu0 0.0
    %88 = vmatpush1.msra.mxu0 %v53
    %89 = vmatprep.subr.mxu0 0.0
    %90 = vmatpush1.msra.mxu0 %v54
    %91 = vmatprep.subr.mxu0 0.0
    %92 = vmatpush1.msra.mxu0 %v55
    %93 = vmatprep.subr.mxu0 0.0
    %94 = vmatpush1.msra.mxu0 %v56
    %95 = vmatprep.subr.mxu0 0.0
    %96 = vmatpush1.msra.mxu0 %v57
    %97 = vmatprep.subr.mxu0 0.0
    %98 = vmatpush1.msra.mxu0 0.0
    %99 = vmatprep.subr.mxu0 0.0
    %100 = vmatpush1.msra.mxu0 0.0
    %101 = vmatprep.subr.mxu0 0.0
    %102 = vmatpush1.msra.mxu0 0.0
    %103 = vmatprep.subr.mxu0 0.0
    %104 = vmatpush1.msra.mxu0 0.0
    %105 = vmatprep.subr.mxu0 0.0
    %106 = vmatpush1.msra.mxu0 0.0
    %107 = vmatprep.subr.mxu0 0.0
    %108 = vmatpush1.msra.mxu0 0.0
    %109 = vmatprep.subr.mxu0 0.0
    %110 = vmatpush1.msra.mxu0 0.0
    %111 = vmatprep.subr.mxu0 0.0
    %112 = vmatpush1.msra.mxu0 0.0
    %113 = vmatprep.subr.mxu0 0.0
    %114 = vmatpush1.msra.mxu0 0.0
    %115 = vmatprep.subr.mxu0 0.0
    %116 = vmatpush1.msra.mxu0 0.0
    %117 = vmatprep.subr.mxu0 0.0
    %118 = vmatpush1.msra.mxu0 0.0
    %119 = vmatprep.subr.mxu0 0.0
    %120 = vmatpush1.msra.mxu0 0.0
    %121 = vmatprep.subr.mxu0 0.0
    %122 = vmatpush1.msra.mxu0 0.0
    %123 = vmatprep.subr.mxu0 0.0
    %124 = vmatpush1.msra.mxu0 0.0
    %125 = vmatprep.subr.mxu0 0.0
    %126 = vmatpush1.msra.mxu0 0.0
    %127 = vmatprep.subr.mxu0 0.0
    %128 = vmatpush1.msra.mxu0 0.0
    %129 = vmatprep.mubr.f32.mxu0 0.0
    %130 = vmatmul.mubr.f32.gmra.mrb[0].mxu0 %v41
    %v131 = vpop.f32.mrb[0].mxu0
    %v132 = vadd.f32 %v63, %v131
    %v133 = vpop.f32.mrb[0].mxu0
    %134 = vdwg.mxu0
    %135 = vst [vmem:[#allocation7] sm:$0xff] %v132
    %v136 = vld [vmem:[#allocation2 + $0x8] sm:$0xff]
    %s137 = scalar_lea.vmem [#allocation5], 128
    %v138 = vld [vmem:[%s137] sm:$0xff]
    %v139 = vld [vmem:[%s137 + $0x8] sm:$0xff]
    %v140 = vld [vmem:[%s137 + $0x10] sm:$0xff]
    %v141 = vld [vmem:[%s137 + $0x18] sm:$0xff]
    %v142 = vld [vmem:[%s137 + $0x20] sm:$0xff]
    %v143 = vld [vmem:[%s137 + $0x28] sm:$0xff]
    %v144 = vld [vmem:[%s137 + $0x30] sm:$0xff]
    %v145 = vld [vmem:[%s137 + $0x38] sm:$0xff]
    %v146 = vld [vmem:[%s137 + $0x40] sm:$0xff]
    %v147 = vld [vmem:[%s137 + $0x48] sm:$0xff]
    %v148 = vld [vmem:[%s137 + $0x50] sm:$0xff]
    %v149 = vld [vmem:[%s137 + $0x58] sm:$0xff]
    %v150 = vld [vmem:[%s137 + $0x60] sm:$0xff]
    %v151 = vld [vmem:[%s137 + $0x68] sm:$0xff]
    %v152 = vld [vmem:[%s137 + $0x70] sm:$0xff]
    %v153 = vld [vmem:[%s137 + $0x78] sm:$0xff]
    %s154 = scalar_lea.vmem %s2, 1
    %v155 = vld [vmem:[%s154] sm:$0x1]
    %v157 = vlaneseq
    %v158 = vshrl.u32 %v157, 7
    %v159 = vsub.s32 0, %v158
    %v160 = vrot.slane %v155, %v159
    %162 = vmatprep.subr.mxu0 0.0
    %163 = vmatpush1.msra.mxu0 %v138
    %164 = vmatprep.subr.mxu0 0.0
    %165 = vmatpush1.msra.mxu0 %v139
    %166 = vmatprep.subr.mxu0 0.0
    %167 = vmatpush1.msra.mxu0 %v140
    %168 = vmatprep.subr.mxu0 0.0
    %169 = vmatpush1.msra.mxu0 %v141
    %170 = vmatprep.subr.mxu0 0.0
    %171 = vmatpush1.msra.mxu0 %v142
    %172 = vmatprep.subr.mxu0 0.0
    %173 = vmatpush1.msra.mxu0 %v143
    %174 = vmatprep.subr.mxu0 0.0
    %175 = vmatpush1.msra.mxu0 %v144
    %176 = vmatprep.subr.mxu0 0.0
    %177 = vmatpush1.msra.mxu0 %v145
    %178 = vmatprep.subr.mxu0 0.0
    %179 = vmatpush1.msra.mxu0 %v146
    %180 = vmatprep.subr.mxu0 0.0
    %181 = vmatpush1.msra.mxu0 %v147
    %182 = vmatprep.subr.mxu0 0.0
    %183 = vmatpush1.msra.mxu0 %v148
    %184 = vmatprep.subr.mxu0 0.0
    %185 = vmatpush1.msra.mxu0 %v149
    %186 = vmatprep.subr.mxu0 0.0
    %187 = vmatpush1.msra.mxu0 %v150
    %188 = vmatprep.subr.mxu0 0.0
    %189 = vmatpush1.msra.mxu0 %v151
    %190 = vmatprep.subr.mxu0 0.0
    %191 = vmatpush1.msra.mxu0 %v152
    %192 = vmatprep.subr.mxu0 0.0
    %193 = vmatpush1.msra.mxu0 %v153
    %194 = vmatprep.subr.mxu0 0.0
    %195 = vmatpush1.msra.mxu0 0.0
    %196 = vmatprep.subr.mxu0 0.0
    %197 = vmatpush1.msra.mxu0 0.0
    %198 = vmatprep.subr.mxu0 0.0
    %199 = vmatpush1.msra.mxu0 0.0
    %200 = vmatprep.subr.mxu0 0.0
    %201 = vmatpush1.msra.mxu0 0.0
    %202 = vmatprep.subr.mxu0 0.0
    %203 = vmatpush1.msra.mxu0 0.0
    %204 = vmatprep.subr.mxu0 0.0
    %205 = vmatpush1.msra.mxu0 0.0
    %206 = vmatprep.subr.mxu0 0.0
    %207 = vmatpush1.msra.mxu0 0.0
    %208 = vmatprep.subr.mxu0 0.0
    %209 = vmatpush1.msra.mxu0 0.0
    %210 = vmatprep.subr.mxu0 0.0
    %211 = vmatpush1.msra.mxu0 0.0
    %212 = vmatprep.subr.mxu0 0.0
    %213 = vmatpush1.msra.mxu0 0.0
    %214 = vmatprep.subr.mxu0 0.0
    %215 = vmatpush1.msra.mxu0 0.0
    %216 = vmatprep.subr.mxu0 0.0
    %217 = vmatpush1.msra.mxu0 0.0
    %218 = vmatprep.subr.mxu0 0.0
    %219 = vmatpush1.msra.mxu0 0.0
    %220 = vmatprep.subr.mxu0 0.0
    %221 = vmatpush1.msra.mxu0 0.0
    %222 = vmatprep.subr.mxu0 0.0
    %223 = vmatpush1.msra.mxu0 0.0
    %224 = vmatprep.subr.mxu0 0.0
    %225 = vmatpush1.msra.mxu0 0.0
    %226 = vmatprep.mubr.f32.mxu0 0.0
    %227 = vmatmul.mubr.f32.gmra.mrb[0].mxu0 %v136
    %v228 = vpop.f32.mrb[0].mxu0
    %v229 = vadd.f32 %v160, %v228
    %v230 = vpop.f32.mrb[0].mxu0
    %231 = vdwg.mxu0
    %232 = vst [vmem:[#allocation7 + $0x8] sm:$0xff] %v229
    %v233 = vld [vmem:[#allocation2 + $0x10] sm:$0xff]
    %s234 = scalar_lea.vmem [#allocation5], 256
    %v235 = vld [vmem:[%s234] sm:$0xff]
    %v236 = vld [vmem:[%s234 + $0x8] sm:$0xff]
    %v237 = vld [vmem:[%s234 + $0x10] sm:$0xff]
    %v238 = vld [vmem:[%s234 + $0x18] sm:$0xff]
    %v239 = vld [vmem:[%s234 + $0x20] sm:$0xff]
    %v240 = vld [vmem:[%s234 + $0x28] sm:$0xff]
    %v241 = vld [vmem:[%s234 + $0x30] sm:$0xff]
    %v242 = vld [vmem:[%s234 + $0x38] sm:$0xff]
    %v243 = vld [vmem:[%s234 + $0x40] sm:$0xff]
    %v244 = vld [vmem:[%s234 + $0x48] sm:$0xff]
    %v245 = vld [vmem:[%s234 + $0x50] sm:$0xff]
    %v246 = vld [vmem:[%s234 + $0x58] sm:$0xff]
    %v247 = vld [vmem:[%s234 + $0x60] sm:$0xff]
    %v248 = vld [vmem:[%s234 + $0x68] sm:$0xff]
    %v249 = vld [vmem:[%s234 + $0x70] sm:$0xff]
    %v250 = vld [vmem:[%s234 + $0x78] sm:$0xff]
    %s251 = scalar_lea.vmem %s2, 2
    %v252 = vld [vmem:[%s251] sm:$0x1]
    %v254 = vlaneseq
    %v255 = vshrl.u32 %v254, 7
    %v256 = vsub.s32 0, %v255
    %v257 = vrot.slane %v252, %v256
    %259 = vmatprep.subr.mxu0 0.0
    %260 = vmatpush1.msra.mxu0 %v235
    %261 = vmatprep.subr.mxu0 0.0
    %262 = vmatpush1.msra.mxu0 %v236
    %263 = vmatprep.subr.mxu0 0.0
    %264 = vmatpush1.msra.mxu0 %v237
    %265 = vmatprep.subr.mxu0 0.0
    %266 = vmatpush1.msra.mxu0 %v238
    %267 = vmatprep.subr.mxu0 0.0
    %268 = vmatpush1.msra.mxu0 %v239
    %269 = vmatprep.subr.mxu0 0.0
    %270 = vmatpush1.msra.mxu0 %v240
    %271 = vmatprep.subr.mxu0 0.0
    %272 = vmatpush1.msra.mxu0 %v241
    %273 = vmatprep.subr.mxu0 0.0
    %274 = vmatpush1.msra.mxu0 %v242
    %275 = vmatprep.subr.mxu0 0.0
    %276 = vmatpush1.msra.mxu0 %v243
    %277 = vmatprep.subr.mxu0 0.0
    %278 = vmatpush1.msra.mxu0 %v244
    %279 = vmatprep.subr.mxu0 0.0
    %280 = vmatpush1.msra.mxu0 %v245
    %281 = vmatprep.subr.mxu0 0.0
    %282 = vmatpush1.msra.mxu0 %v246
    %283 = vmatprep.subr.mxu0 0.0
    %284 = vmatpush1.msra.mxu0 %v247
    %285 = vmatprep.subr.mxu0 0.0
    %286 = vmatpush1.msra.mxu0 %v248
    %287 = vmatprep.subr.mxu0 0.0
    %288 = vmatpush1.msra.mxu0 %v249
    %289 = vmatprep.subr.mxu0 0.0
    %290 = vmatpush1.msra.mxu0 %v250
    %291 = vmatprep.subr.mxu0 0.0
    %292 = vmatpush1.msra.mxu0 0.0
    %293 = vmatprep.subr.mxu0 0.0
    %294 = vmatpush1.msra.mxu0 0.0
    %295 = vmatprep.subr.mxu0 0.0
    %296 = vmatpush1.msra.mxu0 0.0
    %297 = vmatprep.subr.mxu0 0.0
    %298 = vmatpush1.msra.mxu0 0.0
    %299 = vmatprep.subr.mxu0 0.0
    %300 = vmatpush1.msra.mxu0 0.0
    %301 = vmatprep.subr.mxu0 0.0
    %302 = vmatpush1.msra.mxu0 0.0
    %303 = vmatprep.subr.mxu0 0.0
    %304 = vmatpush1.msra.mxu0 0.0
    %305 = vmatprep.subr.mxu0 0.0
    %306 = vmatpush1.msra.mxu0 0.0
    %307 = vmatprep.subr.mxu0 0.0
    %308 = vmatpush1.msra.mxu0 0.0
    %309 = vmatprep.subr.mxu0 0.0
    %310 = vmatpush1.msra.mxu0 0.0
    %311 = vmatprep.subr.mxu0 0.0
    %312 = vmatpush1.msra.mxu0 0.0
    %313 = vmatprep.subr.mxu0 0.0
    %314 = vmatpush1.msra.mxu0 0.0
    %315 = vmatprep.subr.mxu0 0.0
    %316 = vmatpush1.msra.mxu0 0.0
    %317 = vmatprep.subr.mxu0 0.0
    %318 = vmatpush1.msra.mxu0 0.0
    %319 = vmatprep.subr.mxu0 0.0
    %320 = vmatpush1.msra.mxu0 0.0
    %321 = vmatprep.subr.mxu0 0.0
    %322 = vmatpush1.msra.mxu0 0.0
    %323 = vmatprep.mubr.f32.mxu0 0.0
    %324 = vmatmul.mubr.f32.gmra.mrb[0].mxu0 %v233
    %v325 = vpop.f32.mrb[0].mxu0
    %v326 = vadd.f32 %v257, %v325
    %v327 = vpop.f32.mrb[0].mxu0
    %328 = vdwg.mxu0
    %329 = vst [vmem:[#allocation7 + $0x10] sm:$0xff] %v326
    %v330 = vld [vmem:[#allocation2 + $0x18] sm:$0xff]
    %s331 = scalar_lea.vmem [#allocation5], 384
    %v332 = vld [vmem:[%s331] sm:$0xff]
    %v333 = vld [vmem:[%s331 + $0x8] sm:$0xff]
    %v334 = vld [vmem:[%s331 + $0x10] sm:$0xff]
    %v335 = vld [vmem:[%s331 + $0x18] sm:$0xff]
    %v336 = vld [vmem:[%s331 + $0x20] sm:$0xff]
    %v337 = vld [vmem:[%s331 + $0x28] sm:$0xff]
    %v338 = vld [vmem:[%s331 + $0x30] sm:$0xff]
    %v339 = vld [vmem:[%s331 + $0x38] sm:$0xff]
    %v340 = vld [vmem:[%s331 + $0x40] sm:$0xff]
    %v341 = vld [vmem:[%s331 + $0x48] sm:$0xff]
    %v342 = vld [vmem:[%s331 + $0x50] sm:$0xff]
    %v343 = vld [vmem:[%s331 + $0x58] sm:$0xff]
    %v344 = vld [vmem:[%s331 + $0x60] sm:$0xff]
    %v345 = vld [vmem:[%s331 + $0x68] sm:$0xff]
    %v346 = vld [vmem:[%s331 + $0x70] sm:$0xff]
    %v347 = vld [vmem:[%s331 + $0x78] sm:$0xff]
    %s348 = scalar_lea.vmem %s2, 3
    %v349 = vld [vmem:[%s348] sm:$0x1]
    %v351 = vlaneseq
    %v352 = vshrl.u32 %v351, 7
    %v353 = vsub.s32 0, %v352
    %v354 = vrot.slane %v349, %v353
    %356 = vmatprep.subr.mxu0 0.0
    %357 = vmatpush1.msra.mxu0 %v332
    %358 = vmatprep.subr.mxu0 0.0
    %359 = vmatpush1.msra.mxu0 %v333
    %360 = vmatprep.subr.mxu0 0.0
    %361 = vmatpush1.msra.mxu0 %v334
    %362 = vmatprep.subr.mxu0 0.0
    %363 = vmatpush1.msra.mxu0 %v335
    %364 = vmatprep.subr.mxu0 0.0
    %365 = vmatpush1.msra.mxu0 %v336
    %366 = vmatprep.subr.mxu0 0.0
    %367 = vmatpush1.msra.mxu0 %v337
    %368 = vmatprep.subr.mxu0 0.0
    %369 = vmatpush1.msra.mxu0 %v338
    %370 = vmatprep.subr.mxu0 0.0
    %371 = vmatpush1.msra.mxu0 %v339
    %372 = vmatprep.subr.mxu0 0.0
    %373 = vmatpush1.msra.mxu0 %v340
    %374 = vmatprep.subr.mxu0 0.0
    %375 = vmatpush1.msra.mxu0 %v341
    %376 = vmatprep.subr.mxu0 0.0
    %377 = vmatpush1.msra.mxu0 %v342
    %378 = vmatprep.subr.mxu0 0.0
    %379 = vmatpush1.msra.mxu0 %v343
    %380 = vmatprep.subr.mxu0 0.0
    %381 = vmatpush1.msra.mxu0 %v344
    %382 = vmatprep.subr.mxu0 0.0
    %383 = vmatpush1.msra.mxu0 %v345
    %384 = vmatprep.subr.mxu0 0.0
    %385 = vmatpush1.msra.mxu0 %v346
    %386 = vmatprep.subr.mxu0 0.0
    %387 = vmatpush1.msra.mxu0 %v347
    %388 = vmatprep.subr.mxu0 0.0
    %389 = vmatpush1.msra.mxu0 0.0
    %390 = vmatprep.subr.mxu0 0.0
    %391 = vmatpush1.msra.mxu0 0.0
    %392 = vmatprep.subr.mxu0 0.0
    %393 = vmatpush1.msra.mxu0 0.0
    %394 = vmatprep.subr.mxu0 0.0
    %395 = vmatpush1.msra.mxu0 0.0
    %396 = vmatprep.subr.mxu0 0.0
    %397 = vmatpush1.msra.mxu0 0.0
    %398 = vmatprep.subr.mxu0 0.0
    %399 = vmatpush1.msra.mxu0 0.0
    %400 = vmatprep.subr.mxu0 0.0
    %401 = vmatpush1.msra.mxu0 0.0
    %402 = vmatprep.subr.mxu0 0.0
    %403 = vmatpush1.msra.mxu0 0.0
    %404 = vmatprep.subr.mxu0 0.0
    %405 = vmatpush1.msra.mxu0 0.0
    %406 = vmatprep.subr.mxu0 0.0
    %407 = vmatpush1.msra.mxu0 0.0
    %408 = vmatprep.subr.mxu0 0.0
    %409 = vmatpush1.msra.mxu0 0.0
    %410 = vmatprep.subr.mxu0 0.0
    %411 = vmatpush1.msra.mxu0 0.0
    %412 = vmatprep.subr.mxu0 0.0
    %413 = vmatpush1.msra.mxu0 0.0
    %414 = vmatprep.subr.mxu0 0.0
    %415 = vmatpush1.msra.mxu0 0.0
    %416 = vmatprep.subr.mxu0 0.0
    %417 = vmatpush1.msra.mxu0 0.0
    %418 = vmatprep.subr.mxu0 0.0
    %419 = vmatpush1.msra.mxu0 0.0
    %420 = vmatprep.mubr.f32.mxu0 0.0
    %421 = vmatmul.mubr.f32.gmra.mrb[0].mxu0 %v330
    %v422 = vpop.f32.mrb[0].mxu0
    %v423 = vadd.f32 %v354, %v422
    %v424 = vpop.f32.mrb[0].mxu0
    %425 = vdwg.mxu0
    %426 = vst [vmem:[#allocation7 + $0x18] sm:$0xff] %v423
    // Predicated region
    $region22: #{tpu_custom_call.1} parent=1 // pred_check
      _
    $region23: #{tpu_custom_call.1} parent=1 // pred_check_branch
      %428 = sbr.rel (0) target = $region25
    $region24: #{tpu_custom_call.1} parent=1 // pred_region
      %s430 = ssub.s32 512, 512
      %431 = vsyncadd [#allocation4], %s430
      %s433 = sshll.u32 [#allocation7], 4
      %s434 = int_to_ptr.vmem [resolvable:$true] %s433
      %436 = dma.vmem_to_hbm [thread:$0]  %s434, 512, %s3, [#allocation4]
    $region25: #{tpu_custom_call.1} parent=1 // pred_fallthru
      _
    // Predicated region
    $region26: #{tpu_custom_call.1} parent=1 // pred_check
      _
    $region27: #{tpu_custom_call.1} parent=1 // pred_check_branch
      %438 = sbr.rel (0) target = $region29
    $region28: #{tpu_custom_call.1} parent=1 // pred_region
      %439 = dma.done [#allocation4], 512
    $region29: #{tpu_custom_call.1} parent=1 // pred_fallthru
      _
    %440 = vsyncpa [#allocation3], 1
    %441 = vsyncpa [#allocation6], 1
    %442 = vsyncpa [#allocation4], 1

</llo_original>
